<compile_context>
chip_gen: v7x
topology: tpu7x:2x2x1
jax: 0.10.0
libtpu: 0.0.40
codegen_flags: <defaults>
</compile_context>

<pallas_src>
import functools

import jax
import jax.numpy as jnp
from jax import lax
from jax.experimental import pallas as pl
from jax.experimental.pallas import tpu as pltpu

_MIB = 1024 * 1024
_TM_CANDIDATES = (1024, 768, 512, 384, 256, 128)
_TH_CANDIDATES = (2048, 1024, 512, 256, 128)


def _round_up(x, m):
    return (x + m - 1) // m * m


def _device_kind():
    try:
        return jax.devices()[0].device_kind.lower()
    except Exception:
        return ""


def _vmem_capacity_bytes(kind):
    try:
        cap = getattr(pltpu.get_tpu_info(), "vmem_capacity_bytes", None)
        if cap:
            return int(cap)
    except Exception:
        pass
    # Fallback heuristic: v7x has 64 MiB per TensorCore, earlier parts 128 MiB.
    return 64 * _MIB if "7" in kind else 128 * _MIB


def _vmem_plan(cap):
    """(vmem_limit_bytes, usable_bytes_for_tiles) for this generation."""
    if cap >= 128 * _MIB:
        # v5e / v6e: 128 MiB physical; scoped default is only 16-32 MiB, so
        # request ~100 MiB to unlock big tiles.
        limit = 100 * _MIB
    else:
        # v7x: 64 MiB physical per TC -- never request all of it.
        limit = min(56 * _MIB, max(cap - 8 * _MIB, 24 * _MIB))
    usable = int(limit * 0.88)  # headroom for compiler-internal scratch
    return limit, usable


def _tile_bytes(tm, th, ci_p, co_p, cd_isize, out_isize, weight_buffers):
    """Estimated VMEM footprint: double-buffered I/O tiles + f32 accumulator."""
    return (2 * tm * ci_p * cd_isize                 # x tile
            + weight_buffers * ci_p * th * cd_isize  # w1 hidden-slice
            + weight_buffers * th * co_p * cd_isize  # w2 hidden-slice
            + 2 * (th + co_p) * 4                    # biases (f32)
            + 2 * tm * co_p * out_isize              # output tile
            + tm * co_p * 4)                         # f32 accumulator scratch


def _select_tiles(h_p128, ci_p, co_p, cd_isize, usable, tm_max, weight_buffers):
    """Pick (tm_pref, th): maximize tm (HBM reuse), keep th >= 512 if possible."""
    th_floor = min(512, h_p128)
    for tm_c in _TM_CANDIDATES:
        if tm_c > tm_max:
            continue
        for th_c in _TH_CANDIDATES:
            th_c = min(th_c, h_p128)
            if th_c < th_floor:
                continue
            if _tile_bytes(tm_c, th_c, ci_p, co_p, cd_isize, 4,
                           weight_buffers) <= usable:
                return tm_c, th_c
    return min(128, tm_max), min(256, h_p128)


def _select_tm(m, th, ci_p, co_p, cd_isize, out_isize, usable, sub, tm_max,
               two_cores, weight_buffers):
    m_cap = _round_up(m, sub)
    tm = None
    for tm_c in _TM_CANDIDATES:
        if tm_c > tm_max:
            continue
        tm_c = _round_up(min(tm_c, m_cap), sub)
        if _tile_bytes(tm_c, th, ci_p, co_p, cd_isize, out_isize,
                       weight_buffers) <= usable:
            tm = tm_c
            break
    if tm is None:
        tm = _round_up(min(128, m_cap), sub)
    # v7x: megacore sharding is per grid step -- make sure the "parallel"
    # token axis has at least 2 steps so both TensorCores get work.
    if two_cores and m >= 512 and m <= tm:
        tm = _round_up((m + 1) // 2, sub)
    return tm


def _mlp_kernel(x_ref, w1_ref, b1_ref, w2_ref, b2_ref, o_ref, acc_ref, *,
                approximate_gelu):
    k = pl.program_id(1)

    @pl.when(k == 0)
    def _init():
        # Fold the fc2 bias into the accumulator init: saves a full (tm, Co)
        # f32 add + read in the epilogue.
        acc_ref[...] = jnp.broadcast_to(b2_ref[...], acc_ref.shape)

    # fc1 partial: (tm, C_in) @ (C_in, th), f32 accumulation on the MXU.
    h = jnp.dot(x_ref[...], w1_ref[...], preferred_element_type=jnp.float32)
    h = h + b1_ref[...]  # (1, th) broadcast

    if approximate_gelu:
        # tanh-approx GELU: transcendental runs on the otherwise-idle EUP slot.
        h = jax.nn.gelu(h, approximate=True)
    else:
        # exact erf GELU (matches torch.nn.GELU default).
        h = 0.5 * h * (1.0 + lax.erf(h * 0.7071067811865476))

    # drop1 (p=0) and norm (Identity) are no-ops.
    # fc2 partial over this hidden slice; accumulate across the H grid axis.
    acc_ref[...] += jnp.dot(h.astype(w2_ref.dtype), w2_ref[...],
                            preferred_element_type=jnp.float32)

    @pl.when(k == pl.num_programs(1) - 1)
    def _finalize():
        # drop2 (p=0) is a no-op; b2 already folded into acc.
        o_ref[...] = acc_ref[...].astype(o_ref.dtype)


def make_mlp(w1, b1, w2, b2, *, compute_dtype=jnp.bfloat16,
             approximate_gelu=None, out_dtype=None, tm=None, th=None,
             weight_buffers=2, interpret=False):
    """Pad + cast the weights ONCE and return a reusable forward function.

    w1: (C_in, H), b1: (H,), w2: (H, C_out), b2: (C_out,)
    (pre-transposed: the kernel computes x @ W + b, identical math to torch's
    nn.Linear x @ W.T + b).  The returned fn maps (B, N, C_in) -> (B, N, C_out).
    """
    C_in, H = w1.shape
    H2, C_out = w2.shape
    assert H2 == H and b1.shape == (H,) and b2.shape == (C_out,)

    cd = jnp.dtype(compute_dtype)
    if approximate_gelu is None:
        # Production low-precision path uses tanh GELU (EUP slot, well inside
        # bf16 rounding of erf GELU); f32 path stays bit-faithful exact erf.
        approximate_gelu = (cd != jnp.dtype(jnp.float32))

    kind = _device_kind()
    cap = _vmem_capacity_bytes(kind)
    vmem_limit, usable = _vmem_plan(cap)
    tm_max = 512 if "v5" in kind else 1024   # v5e crossover ~240 FLOP/B
    two_cores = ("7" in kind) or (cap < 128 * _MIB)

    Ci_p = _round_up(C_in, 128)              # lane-dense input
    Co_p = _round_up(C_out, 128)             # lane-dense output -> unmasked vst
    H_p128 = _round_up(H, 128)

    if th is None:
        _, th = _select_tiles(H_p128, Ci_p, Co_p, cd.itemsize, usable, tm_max,
                              weight_buffers)
    th = min(th, H_p128)
    H_p = _round_up(H, th)

    # ---- one-time weight pad + cast (kept out of the per-call hot path) -----
    w1_p = jnp.pad(w1, ((0, Ci_p - C_in), (0, H_p - H))).astype(cd)
    w2_p = jnp.pad(w2, ((0, H_p - H), (0, Co_p - C_out))).astype(cd)
    b1_p = jnp.pad(b1, (0, H_p - H)).astype(jnp.float32).reshape(1, H_p)
    b2_p = jnp.pad(b2, (0, Co_p - C_out)).astype(jnp.float32).reshape(1, Co_p)

    grid_h = H_p // th
    kernel = functools.partial(_mlp_kernel, approximate_gelu=approximate_gelu)

    w_spec_kwargs = {}
    if weight_buffers is not None and weight_buffers > 2:
        # Deeper buffering on the streamed weight operands only (v7x knob when
        # profiling shows exposed DMA).
        w_spec_kwargs["pipeline_mode"] = pl.Buffered(weight_buffers)

    def forward(x):
        B, N, c_in = x.shape
        assert c_in == C_in
        M = B * N
        odt = out_dtype if out_dtype is not None else x.dtype
        out_isize = jnp.dtype(odt).itemsize
        sub = max(8, (8 * 4) // cd.itemsize)     # bf16 -> 16 sublanes, f32 -> 8

        tm_sel = tm if tm is not None else _select_tm(
            M, th, Ci_p, Co_p, cd.itemsize, out_isize, usable, sub, tm_max,
            two_cores, weight_buffers or 2)
        tm_sel = _round_up(min(tm_sel, _round_up(M, sub)), sub)
        M_p = _round_up(M, tm_sel)
        grid_m = M_p // tm_sel

        x2 = x.reshape(M, C_in)
        if (M_p, Ci_p) != (M, C_in):
            x2 = jnp.pad(x2, ((0, M_p - M), (0, Ci_p - C_in)))
        x2 = x2.astype(cd)                       # halves x DMA bytes for bf16

        cost = pl.CostEstimate(
            flops=2 * M_p * Ci_p * H_p + 2 * M_p * H_p * Co_p,
            transcendentals=(M_p * H_p) if approximate_gelu else 0,
            bytes_accessed=(M_p * Ci_p * cd.itemsize
                            + grid_m * (Ci_p * H_p + H_p * Co_p) * cd.itemsize
                            + M_p * Co_p * out_isize),
        )

        out = pl.pallas_call(
            kernel,
            out_shape=jax.ShapeDtypeStruct((M_p, Co_p), odt),
            grid_spec=pltpu.PrefetchScalarGridSpec(
                num_scalar_prefetch=0,
                grid=(grid_m, grid_h),
                in_specs=[
                    pl.BlockSpec((tm_sel, Ci_p), lambda i, k: (i, 0)),   # x
                    pl.BlockSpec((Ci_p, th), lambda i, k: (0, k),        # w1
                                 **w_spec_kwargs),
                    pl.BlockSpec((1, th), lambda i, k: (0, k)),           # b1
                    pl.BlockSpec((th, Co_p), lambda i, k: (k, 0),         # w2
                                 **w_spec_kwargs),
                    pl.BlockSpec((1, Co_p), lambda i, k: (0, 0)),          # b2
                ],
                out_specs=pl.BlockSpec((tm_sel, Co_p), lambda i, k: (i, 0)),
                scratch_shapes=[pltpu.VMEM((tm_sel, Co_p), jnp.float32)],
            ),
            compiler_params=pltpu.CompilerParams(
                dimension_semantics=("parallel", "arbitrary"),
                vmem_limit_bytes=vmem_limit,
            ),
            cost_estimate=cost,
            interpret=interpret,
        )(x2, w1_p, b1_p, w2_p, b2_p)

        if (M_p, Co_p) != (M, C_out):
            out = out[:M, :C_out]   # skipped entirely when already aligned
        return out.reshape(B, N, C_out)

    return forward


def mlp_pallas(x, w1, b1, w2, b2, **kwargs):
    """One-shot convenience wrapper.  For repeated calls (production), prefer
    make_mlp(...) so the weight pad/cast is done once and cached."""
    return make_mlp(w1, b1, w2, b2, **kwargs)(x)


def mlp_reference(x, w1, b1, w2, b2, *, approximate_gelu=False):
    h = jnp.einsum("bnc,ch->bnh", x, w1) + b1
    h = jax.nn.gelu(h, approximate=approximate_gelu)
    return jnp.einsum("bnh,ho->bno", h, w2) + b2


if __name__ == "__main__":
    # Small shapes consistent with the module: in_channels=32, hidden=128, out=32.
    B, N, C_in, HID = 2, 8, 32, 128
    C_out = C_in

    key = jax.random.PRNGKey(0)
    kx, k1, k2, k3, k4 = jax.random.split(key, 5)

    x = jax.random.normal(kx, (B, N, C_in), dtype=jnp.float32)
    # Deterministic synthetic parameters (stored as (in, out) for x @ W).
    w1 = jax.random.normal(k1, (C_in, HID), dtype=jnp.float32) * 0.05
    b1 = jax.random.normal(k2, (HID,), dtype=jnp.float32) * 0.05
    w2 = jax.random.normal(k3, (HID, C_out), dtype=jnp.float32) * 0.05
    b2 = jax.random.normal(k4, (C_out,), dtype=jnp.float32) * 0.05

    # f32 exact-erf path (bit-faithful to torch.nn.GELU default): tight check.
    y_f32 = mlp_pallas(x, w1, b1, w2, b2, compute_dtype=jnp.float32)
    jax.block_until_ready(y_f32)
    y_ref = mlp_reference(x, w1, b1, w2, b2, approximate_gelu=False)
    assert y_f32.shape == (B, N, C_out)
    assert jnp.allclose(y_f32, y_ref, atol=1e-5, rtol=1e-5), "f32 mismatch vs reference"

    # Production config: cached padded/cast weights, bf16 compute + f32 MXU
    # accumulation, tanh GELU (EUP slot).  Looser tolerance.
    mlp_bf16 = make_mlp(w1, b1, w2, b2, compute_dtype=jnp.bfloat16)
    y_bf16 = mlp_bf16(x)
    jax.block_until_ready(y_bf16)
    y_ref_tanh = mlp_reference(x, w1, b1, w2, b2, approximate_gelu=True)
    assert y_bf16.shape == (B, N, C_out)
    assert jnp.allclose(y_bf16.astype(jnp.float32), y_ref_tanh,
                        atol=2e-2, rtol=2e-2), "bf16 mismatch vs reference"

    # TODO(synk): Dropout with p>0 (training mode) would need pltpu PRNG; module
    # defaults drop=0.0 and norm_layer=None are identities, so nothing is lost.
    print("KERNEL_OK")
</pallas_src>

<mosaic_0001>
module attributes {stable_mosaic.version = 11 : i64} {
  func.func @_mlp_kernel(%arg0: i32, %arg1: i32, %arg2: memref<16x128xf32, #tpu.memory_space<vmem>>, %arg3: memref<128x128xf32, #tpu.memory_space<vmem>>, %arg4: memref<1x128xf32, #tpu.memory_space<vmem>>, %arg5: memref<128x128xf32, #tpu.memory_space<vmem>>, %arg6: memref<1x128xf32, #tpu.memory_space<vmem>>, %arg7: memref<16x128xf32, #tpu.memory_space<vmem>>, %arg8: memref<16x128xf32, #tpu.memory_space<vmem>>) attributes {dimension_semantics = [#tpu.dimension_semantics<parallel>, #tpu.dimension_semantics<arbitrary>], iteration_bounds = array<i64: 1, 1>, scalar_prefetch = 0 : i64, scratch_operands = 1 : i64, tpu.core_type = #tpu.core_type<tc>, window_params = [{transform_indices = @transform_0, window_bounds = array<i64: 16, 128>}, {transform_indices = @transform_1, window_bounds = array<i64: 128, 128>}, {transform_indices = @transform_2, window_bounds = array<i64: 1, 128>}, {transform_indices = @transform_3, window_bounds = array<i64: 128, 128>}, {pipeline_mode = #tpu.pipeline_mode<synchronous>, transform_indices = @transform_4, window_bounds = array<i64: 1, 128>}, {transform_indices = @transform_5, window_bounds = array<i64: 16, 128>}]} {
    %c0_i32 = arith.constant 0 : i32
    %0 = arith.cmpi eq, %arg1, %c0_i32 : i32
    %1 = arith.extui %0 : i1 to i32
    %c0_i32_0 = arith.constant 0 : i32
    %2 = arith.cmpi ne, %1, %c0_i32_0 : i32
    scf.if %2 {
      %c0_18 = arith.constant 0 : index
      %c0_19 = arith.constant 0 : index
      %25 = vector.load %arg6[%c0_18, %c0_19] : memref<1x128xf32, #tpu.memory_space<vmem>>, vector<1x128xf32>
      %26 = vector.shape_cast %25 : vector<1x128xf32> to vector<1x128xf32>
      %27 = vector.broadcast %26 : vector<1x128xf32> to vector<16x128xf32>
      %c0_20 = arith.constant 0 : index
      %c0_21 = arith.constant 0 : index
      %28 = vector.load %arg8[%c0_20, %c0_21] : memref<16x128xf32, #tpu.memory_space<vmem>>, vector<16x128xf32>
      tpu.vector_store %arg8[%c0_20, %c0_21], %27 {strides = array<i32>} : memref<16x128xf32, #tpu.memory_space<vmem>>, vector<16x128xf32>,
    } else {
    }
    %c0 = arith.constant 0 : index
    %c0_1 = arith.constant 0 : index
    %3 = vector.load %arg2[%c0, %c0_1] : memref<16x128xf32, #tpu.memory_space<vmem>>, vector<16x128xf32>
    %c0_2 = arith.constant 0 : index
    %c0_3 = arith.constant 0 : index
    %4 = vector.load %arg3[%c0_2, %c0_3] : memref<128x128xf32, #tpu.memory_space<vmem>>, vector<128x128xf32>
    %cst = arith.constant dense<0.000000e+00> : vector<16x128xf32>
    %5 = tpu.matmul %3, %4, %cst {dimension_numbers = #tpu.dot_dimension_numbers<[1], [0], [0], [1], [0, 0, 1, 1], [], []>} : vector<16x128xf32>, vector<128x128xf32>, vector<16x128xf32> -> vector<16x128xf32>
    %c0_4 = arith.constant 0 : index
    %c0_5 = arith.constant 0 : index
    %6 = vector.load %arg4[%c0_4, %c0_5] : memref<1x128xf32, #tpu.memory_space<vmem>>, vector<1x128xf32>
    %7 = vector.broadcast %6 : vector<1x128xf32> to vector<16x128xf32>
    %8 = arith.addf %5, %7 : vector<16x128xf32>
    %cst_6 = arith.constant 5.000000e-01 : f32
    %9 = vector.broadcast %cst_6 : f32 to vector<16x128xf32>
    %10 = arith.mulf %9, %8 : vector<16x128xf32>
    %cst_7 = arith.constant 0.707106769 : f32
    %11 = vector.broadcast %cst_7 : f32 to vector<16x128xf32>
    %12 = arith.mulf %8, %11 : vector<16x128xf32>
    %13 = math.erf %12 : vector<16x128xf32>
    %cst_8 = arith.constant 1.000000e+00 : f32
    %14 = vector.broadcast %cst_8 : f32 to vector<16x128xf32>
    %15 = arith.addf %14, %13 : vector<16x128xf32>
    %16 = arith.mulf %10, %15 : vector<16x128xf32>
    %c0_9 = arith.constant 0 : index
    %c0_10 = arith.constant 0 : index
    %17 = vector.load %arg8[%c0_9, %c0_10] : memref<16x128xf32, #tpu.memory_space<vmem>>, vector<16x128xf32>
    %c0_11 = arith.constant 0 : index
    %c0_12 = arith.constant 0 : index
    %18 = vector.load %arg5[%c0_11, %c0_12] : memref<128x128xf32, #tpu.memory_space<vmem>>, vector<128x128xf32>
    %cst_13 = arith.constant dense<0.000000e+00> : vector<16x128xf32>
    %19 = tpu.matmul %16, %18, %cst_13 {dimension_numbers = #tpu.dot_dimension_numbers<[1], [0], [0], [1], [0, 0, 1, 1], [], []>} : vector<16x128xf32>, vector<128x128xf32>, vector<16x128xf32> -> vector<16x128xf32>
    %20 = arith.addf %17, %19 : vector<16x128xf32>
    %c0_14 = arith.constant 0 : index
    %c0_15 = arith.constant 0 : index
    %21 = vector.load %arg8[%c0_14, %c0_15] : memref<16x128xf32, #tpu.memory_space<vmem>>, vector<16x128xf32>
    tpu.vector_store %arg8[%c0_14, %c0_15], %20 {strides = array<i32>} : memref<16x128xf32, #tpu.memory_space<vmem>>, vector<16x128xf32>,
    %c0_i32_16 = arith.constant 0 : i32
    %22 = arith.cmpi eq, %arg1, %c0_i32_16 : i32
    %23 = arith.extui %22 : i1 to i32
    %c0_i32_17 = arith.constant 0 : i32
    %24 = arith.cmpi ne, %23, %c0_i32_17 : i32
    scf.if %24 {
      %c0_18 = arith.constant 0 : index
      %c0_19 = arith.constant 0 : index
      %25 = vector.load %arg8[%c0_18, %c0_19] : memref<16x128xf32, #tpu.memory_space<vmem>>, vector<16x128xf32>
      %c0_20 = arith.constant 0 : index
      %c0_21 = arith.constant 0 : index
      %26 = vector.load %arg7[%c0_20, %c0_21] : memref<16x128xf32, #tpu.memory_space<vmem>>, vector<16x128xf32>
      tpu.vector_store %arg7[%c0_20, %c0_21], %25 {strides = array<i32>} : memref<16x128xf32, #tpu.memory_space<vmem>>, vector<16x128xf32>,
    } else {
    }
    return
  }
  func.func @transform_0(%arg0: i32, %arg1: i32) -> (i32, i32) {
    %c0_i32 = arith.constant 0 : i32
    %c0_i32_0 = arith.constant 0 : i32
    return %arg0, %c0_i32 : i32, i32
  }
  func.func @transform_1(%arg0: i32, %arg1: i32) -> (i32, i32) {
    %c0_i32 = arith.constant 0 : i32
    %c0_i32_0 = arith.constant 0 : i32
    return %c0_i32, %arg1 : i32, i32
  }
  func.func @transform_2(%arg0: i32, %arg1: i32) -> (i32, i32) {
    %c0_i32 = arith.constant 0 : i32
    %c0_i32_0 = arith.constant 0 : i32
    return %c0_i32, %arg1 : i32, i32
  }
  func.func @transform_3(%arg0: i32, %arg1: i32) -> (i32, i32) {
    %c0_i32 = arith.constant 0 : i32
    %c0_i32_0 = arith.constant 0 : i32
    return %arg1, %c0_i32 : i32, i32
  }
  func.func @transform_4(%arg0: i32, %arg1: i32) -> (i32, i32) {
    %c0_i32 = arith.constant 0 : i32
    %c0_i32_0 = arith.constant 0 : i32
    %c0_i32_1 = arith.constant 0 : i32
    return %c0_i32, %c0_i32_0 : i32, i32
  }
  func.func @transform_5(%arg0: i32, %arg1: i32) -> (i32, i32) {
    %c0_i32 = arith.constant 0 : i32
    %c0_i32_0 = arith.constant 0 : i32
    return %arg0, %c0_i32 : i32, i32
  }
}

</mosaic_0001>

<llo_original>
// kernel: tpu_custom_call.1
$region0: #{tpu_custom_call.1}
  #allocation0 [shape = 'u32[]', space=smem, size = 0x4, offset = 0x4, fixed_abs, tag = 'smem constant byte address 0x4 - core index']
  #allocation1 [shape = 'u32[144,128]{1,0:T(1,128)}', space=vmem, size = 0x12000, scoped, tag = 'internal scratch']
  #allocation2 [shape = 'f32[16,128]{1,0:T(8,128)}', space=vmem, size = 0x2000, scoped, tag = 'scratch operand']
  %s0 = inlined_call_operand.hbm [shape: f32[16,128], index: 0, kind: input, shape index: {}]
  %s1 = inlined_call_operand.hbm [shape: f32[128,128], index: 1, kind: input, shape index: {}]
  %s2 = inlined_call_operand.hbm [shape: f32[1,128], index: 2, kind: input, shape index: {}]
  %s3 = inlined_call_operand.hbm [shape: f32[128,128], index: 3, kind: input, shape index: {}]
  %s4 = inlined_call_operand.hbm [shape: f32[1,128], index: 4, kind: input, shape index: {}]
  %s5 = inlined_call_operand.hbm [shape: f32[16,128], index: 5, kind: output, shape index: {}]
  %s6 = sld [smem:[#allocation0]]
  $region58: #{tpu_custom_call.1} parent=0
    _
  %s8 = ssub.s32 1, %s6
  %s9 = scalar_select 0, %s8, %s6
  $region1: #{tpu_custom_call.1} parent=0
    #allocation3 [shape = 'u8[8192]{0}', space=vmem, size = 0x2000, scoped, tag = 'input window, operand 0, single buffered']
    #allocation4 [shape = 's32[1]{0}', space=sflag, size = 0x4, scoped, tag = 'scoped memory for tpu_custom_call.1']
    #allocation5 [shape = 's32[1]{0}', space=sflag, size = 0x4, scoped, tag = 'scoped memory for tpu_custom_call.1']
    #allocation6 [shape = 'u8[65536]{0}', space=vmem, size = 0x10000, scoped, tag = 'input window, operand 1, single buffered']
    #allocation7 [shape = 's32[1]{0}', space=sflag, size = 0x4, scoped, tag = 'scoped memory for tpu_custom_call.1']
    #allocation8 [shape = 'u8[512]{0}', space=vmem, size = 0x400, scoped, tag = 'input window, operand 2, single buffered']
    #allocation9 [shape = 'u8[65536]{0}', space=vmem, size = 0x10000, scoped, tag = 'input window, operand 3, single buffered']
    #allocation10 [shape = 's32[1]{0}', space=sflag, size = 0x4, scoped, tag = 'scoped memory for tpu_custom_call.1']
    #allocation11 [shape = 'u8[512]{0}', space=vmem, size = 0x400, scoped, tag = 'input window, operand 4, single buffered']
    #allocation12 [shape = 'u8[8192]{0}', space=vmem, size = 0x2000, scoped, tag = 'output window, operand 0, single buffered']
    %10 = vsyncpa [#allocation4], 0
    %11 = vsyncpa [#allocation7], 0
    %12 = vsyncpa [#allocation10], 0
    %13 = vsyncpa [#allocation5], 0
    // Predicated region
    $region2: #{tpu_custom_call.1} parent=1 // pred_check
      _
    $region3: #{tpu_custom_call.1} parent=1 // pred_check_branch
      %15 = sbr.rel (0) target = $region5
    $region4: #{tpu_custom_call.1} parent=1 // pred_region
      %s17 = ssub.s32 256, 256
      %18 = vsyncadd [#allocation4], %s17
      %s19 = sshll.u32 [#allocation3], 4
      %s20 = int_to_ptr.vmem [resolvable:$true] %s19
      %25 = dma.hbm_to_vmem [thread:$0]  %s0, 256, %s20, [#allocation4], 128, 128, 8
    $region5: #{tpu_custom_call.1} parent=1 // pred_fallthru
      _
    // Predicated region
    $region6: #{tpu_custom_call.1} parent=1 // pred_check
      _
    $region7: #{tpu_custom_call.1} parent=1 // pred_check_branch
      %27 = sbr.rel (0) target = $region9
    $region8: #{tpu_custom_call.1} parent=1 // pred_region
      %s29 = ssub.s32 2048, 2048
      %30 = vsyncadd [#allocation7], %s29
      %s31 = sshll.u32 [#allocation6], 4
      %s32 = int_to_ptr.vmem [resolvable:$true] %s31
      %37 = dma.hbm_to_vmem [thread:$0]  %s1, 2048, %s32, [#allocation7], 128, 128, 8
    $region9: #{tpu_custom_call.1} parent=1 // pred_fallthru
      _
    // Predicated region
    $region10: #{tpu_custom_call.1} parent=1 // pred_check
      _
    $region11: #{tpu_custom_call.1} parent=1 // pred_check_branch
      %39 = sbr.rel (0) target = $region13
    $region12: #{tpu_custom_call.1} parent=1 // pred_region
      %s41 = ssub.s32 16, 16
      %42 = vsyncadd [#allocation7], %s41
      %s44 = sshll.u32 [#allocation8], 4
      %s45 = int_to_ptr.vmem [resolvable:$true] %s44
      %47 = dma.hbm_to_vmem [thread:$0]  %s2, 16, %s45, [#allocation7]
    $region13: #{tpu_custom_call.1} parent=1 // pred_fallthru
      _
    // Predicated region
    $region14: #{tpu_custom_call.1} parent=1 // pred_check
      _
    $region15: #{tpu_custom_call.1} parent=1 // pred_check_branch
      %49 = sbr.rel (0) target = $region17
    $region16: #{tpu_custom_call.1} parent=1 // pred_region
      %s51 = ssub.s32 2048, 2048
      %52 = vsyncadd [#allocation10], %s51
      %s53 = sshll.u32 [#allocation9], 4
      %s54 = int_to_ptr.vmem [resolvable:$true] %s53
      %59 = dma.hbm_to_vmem [thread:$0]  %s3, 2048, %s54, [#allocation10], 128, 128, 8
    $region17: #{tpu_custom_call.1} parent=1 // pred_fallthru
      _
    // Predicated region
    $region18: #{tpu_custom_call.1} parent=1 // pred_check
      _
    $region19: #{tpu_custom_call.1} parent=1 // pred_check_branch
      %61 = sbr.rel (0) target = $region21
    $region20: #{tpu_custom_call.1} parent=1 // pred_region
      %s63 = ssub.s32 16, 16
      %64 = vsyncadd [#allocation10], %s63
      %s66 = sshll.u32 [#allocation11], 4
      %s67 = int_to_ptr.vmem [resolvable:$true] %s66
      %69 = dma.hbm_to_vmem [thread:$0]  %s4, 16, %s67, [#allocation10]
    $region21: #{tpu_custom_call.1} parent=1 // pred_fallthru
      _
    // Predicated region
    $region22: #{tpu_custom_call.1} parent=1 // pred_check
      _
    $region23: #{tpu_custom_call.1} parent=1 // pred_check_branch
      %71 = sbr.rel (0) target = $region25
    $region24: #{tpu_custom_call.1} parent=1 // pred_region
      %72 = dma.done [#allocation4], 256
    $region25: #{tpu_custom_call.1} parent=1 // pred_fallthru
      _
    // Predicated region
    $region26: #{tpu_custom_call.1} parent=1 // pred_check
      _
    $region27: #{tpu_custom_call.1} parent=1 // pred_check_branch
      %74 = sbr.rel (0) target = $region29
    $region28: #{tpu_custom_call.1} parent=1 // pred_region
      %75 = dma.done [#allocation7], 2048
    $region29: #{tpu_custom_call.1} parent=1 // pred_fallthru
      _
    // Predicated region
    $region30: #{tpu_custom_call.1} parent=1 // pred_check
      _
    $region31: #{tpu_custom_call.1} parent=1 // pred_check_branch
      %77 = sbr.rel (0) target = $region33
    $region32: #{tpu_custom_call.1} parent=1 // pred_region
      %78 = dma.done [#allocation7], 16
    $region33: #{tpu_custom_call.1} parent=1 // pred_fallthru
      _
    // Predicated region
    $region34: #{tpu_custom_call.1} parent=1 // pred_check
      _
    $region35: #{tpu_custom_call.1} parent=1 // pred_check_branch
      %80 = sbr.rel (0) target = $region37
    $region36: #{tpu_custom_call.1} parent=1 // pred_region
      %81 = dma.done [#allocation10], 2048
    $region37: #{tpu_custom_call.1} parent=1 // pred_fallthru
      _
    // Predicated region
    $region38: #{tpu_custom_call.1} parent=1 // pred_check
      _
    $region39: #{tpu_custom_call.1} parent=1 // pred_check_branch
      %83 = sbr.rel (0) target = $region41
    $region40: #{tpu_custom_call.1} parent=1 // pred_region
      %84 = dma.done [#allocation10], 16
    $region41: #{tpu_custom_call.1} parent=1 // pred_fallthru
      _
    %p85 = scmp.eq.s32.totalorder 0, 0
    // Predicated region
    $region42: #{tpu_custom_call.1} parent=1 // pred_check
      %p86 = pneg %p85
    $region43: #{tpu_custom_call.1} parent=1 // pred_check_branch
      %88 = sbr.rel (%p86) target = $region45
    $region44: #{tpu_custom_call.1} parent=1 // pred_region
      %v89 = vld [vmem:[#allocation11] sm:$0x1]
      %v91 = vlaneseq
      %v92 = vshrl.u32 %v91, 7
      %v93 = vsub.s32 0, %v92
      %v94 = vrot.slane %v89, %v93
      %96 = vst [vmem:[#allocation2] sm:$0xff] %v94
      %97 = vst [vmem:[#allocation2 + $0x8] sm:$0xff] %v94
    $region45: #{tpu_custom_call.1} parent=1 // pred_fallthru
      _
    %v98 = vld [vmem:[#allocation3] sm:$0xff]
    %v99 = vld [vmem:[#allocation3 + $0x8] sm:$0xff]
    %v100 = vld [vmem:[#allocation6] sm:$0xff]
    %v101 = vld [vmem:[#allocation6 + $0x8] sm:$0xff]
    %v102 = vld [vmem:[#allocation6 + $0x10] sm:$0xff]
    %v103 = vld [vmem:[#allocation6 + $0x18] sm:$0xff]
    %v104 = vld [vmem:[#allocation6 + $0x20] sm:$0xff]
    %v105 = vld [vmem:[#allocation6 + $0x28] sm:$0xff]
    %v106 = vld [vmem:[#allocation6 + $0x30] sm:$0xff]
    %v107 = vld [vmem:[#allocation6 + $0x38] sm:$0xff]
    %v108 = vld [vmem:[#allocation6 + $0x40] sm:$0xff]
    %v109 = vld [vmem:[#allocation6 + $0x48] sm:$0xff]
    %v110 = vld [vmem:[#allocation6 + $0x50] sm:$0xff]
    %v111 = vld [vmem:[#allocation6 + $0x58] sm:$0xff]
    %v112 = vld [vmem:[#allocation6 + $0x60] sm:$0xff]
    %v113 = vld [vmem:[#allocation6 + $0x68] sm:$0xff]
    %v114 = vld [vmem:[#allocation6 + $0x70] sm:$0xff]
    %v115 = vld [vmem:[#allocation6 + $0x78] sm:$0xff]
    %v116 = vld [vmem:[#allocation8] sm:$0x1]
    %v118 = vlaneseq
    %v119 = vshrl.u32 %v118, 7
    %v120 = vsub.s32 0, %v119
    %v121 = vrot.slane %v116, %v120
    %123 = vmatprep.subr.mxu0 0.0
    %124 = vmatpush1.msra.mxu0 %v100
    %125 = vmatprep.subr.mxu0 0.0
    %126 = vmatpush1.msra.mxu0 %v101
    %127 = vmatprep.subr.mxu0 0.0
    %128 = vmatpush1.msra.mxu0 %v102
    %129 = vmatprep.subr.mxu0 0.0
    %130 = vmatpush1.msra.mxu0 %v103
    %131 = vmatprep.subr.mxu0 0.0
    %132 = vmatpush1.msra.mxu0 %v104
    %133 = vmatprep.subr.mxu0 0.0
    %134 = vmatpush1.msra.mxu0 %v105
    %135 = vmatprep.subr.mxu0 0.0
    %136 = vmatpush1.msra.mxu0 %v106
    %137 = vmatprep.subr.mxu0 0.0
    %138 = vmatpush1.msra.mxu0 %v107
    %139 = vmatprep.subr.mxu0 0.0
    %140 = vmatpush1.msra.mxu0 %v108
    %141 = vmatprep.subr.mxu0 0.0
    %142 = vmatpush1.msra.mxu0 %v109
    %143 = vmatprep.subr.mxu0 0.0
    %144 = vmatpush1.msra.mxu0 %v110
    %145 = vmatprep.subr.mxu0 0.0
    %146 = vmatpush1.msra.mxu0 %v111
    %147 = vmatprep.subr.mxu0 0.0
    %148 = vmatpush1.msra.mxu0 %v112
    %149 = vmatprep.subr.mxu0 0.0
    %150 = vmatpush1.msra.mxu0 %v113
    %151 = vmatprep.subr.mxu0 0.0
    %152 = vmatpush1.msra.mxu0 %v114
    %153 = vmatprep.subr.mxu0 0.0
    %154 = vmatpush1.msra.mxu0 %v115
    %155 = vmatprep.subr.mxu0 0.0
    %156 = vmatpush1.msra.mxu0 0.0
    %157 = vmatprep.subr.mxu0 0.0
    %158 = vmatpush1.msra.mxu0 0.0
    %159 = vmatprep.subr.mxu0 0.0
    %160 = vmatpush1.msra.mxu0 0.0
    %161 = vmatprep.subr.mxu0 0.0
    %162 = vmatpush1.msra.mxu0 0.0
    %163 = vmatprep.subr.mxu0 0.0
    %164 = vmatpush1.msra.mxu0 0.0
    %165 = vmatprep.subr.mxu0 0.0
    %166 = vmatpush1.msra.mxu0 0.0
    %167 = vmatprep.subr.mxu0 0.0
    %168 = vmatpush1.msra.mxu0 0.0
    %169 = vmatprep.subr.mxu0 0.0
    %170 = vmatpush1.msra.mxu0 0.0
    %171 = vmatprep.subr.mxu0 0.0
    %172 = vmatpush1.msra.mxu0 0.0
    %173 = vmatprep.subr.mxu0 0.0
    %174 = vmatpush1.msra.mxu0 0.0
    %175 = vmatprep.subr.mxu0 0.0
    %176 = vmatpush1.msra.mxu0 0.0
    %177 = vmatprep.subr.mxu0 0.0
    %178 = vmatpush1.msra.mxu0 0.0
    %179 = vmatprep.subr.mxu0 0.0
    %180 = vmatpush1.msra.mxu0 0.0
    %181 = vmatprep.subr.mxu0 0.0
    %182 = vmatpush1.msra.mxu0 0.0
    %183 = vmatprep.subr.mxu0 0.0
    %184 = vmatpush1.msra.mxu0 0.0
    %185 = vmatprep.subr.mxu0 0.0
    %186 = vmatpush1.msra.mxu0 0.0
    %187 = vmatprep.mubr.f32.mxu0 0.0
    %188 = vmatmul.mubr.f32.gmra.mrb[0].mxu0 %v98
    %v189 = vpop.f32.mrb[0].mxu0
    %v190 = vadd.f32 %v121, %v189
    %v191 = vpop.f32.mrb[0].mxu0
    %192 = vmatprep.mubr.f32.mxu0 0.0
    %193 = vmatmul.mubr.f32.gmra.mrb[0].mxu0 %v99
    %v194 = vpop.f32.mrb[0].mxu0
    %v195 = vadd.f32 %v121, %v194
    %v196 = vpop.f32.mrb[0].mxu0
    %197 = vdwg.mxu0
    %v198 = vmul.f32 %v190, 0.5
    %v199 = vmul.f32 %v195, 0.5
    %v200 = vmul.f32 %v190, 0.70710677
    %v201 = vmul.f32 %v195, 0.70710677
    %v202 = verf.f32.pop %v200
    %v203 = verf.f32.pop %v201
    %v204 = vadd.f32 %v202, 1.0
    %v205 = vadd.f32 %v203, 1.0
    %v206 = vmul.f32 %v198, %v204
    %v207 = vmul.f32 %v199, %v205
    %v208 = vld [vmem:[#allocation2] sm:$0xff]
    %v209 = vld [vmem:[#allocation2 + $0x8] sm:$0xff]
    %v210 = vld [vmem:[#allocation9] sm:$0xff]
    %v211 = vld [vmem:[#allocation9 + $0x8] sm:$0xff]
    %v212 = vld [vmem:[#allocation9 + $0x10] sm:$0xff]
    %v213 = vld [vmem:[#allocation9 + $0x18] sm:$0xff]
    %v214 = vld [vmem:[#allocation9 + $0x20] sm:$0xff]
    %v215 = vld [vmem:[#allocation9 + $0x28] sm:$0xff]
    %v216 = vld [vmem:[#allocation9 + $0x30] sm:$0xff]
    %v217 = vld [vmem:[#allocation9 + $0x38] sm:$0xff]
    %v218 = vld [vmem:[#allocation9 + $0x40] sm:$0xff]
    %v219 = vld [vmem:[#allocation9 + $0x48] sm:$0xff]
    %v220 = vld [vmem:[#allocation9 + $0x50] sm:$0xff]
    %v221 = vld [vmem:[#allocation9 + $0x58] sm:$0xff]
    %v222 = vld [vmem:[#allocation9 + $0x60] sm:$0xff]
    %v223 = vld [vmem:[#allocation9 + $0x68] sm:$0xff]
    %v224 = vld [vmem:[#allocation9 + $0x70] sm:$0xff]
    %v225 = vld [vmem:[#allocation9 + $0x78] sm:$0xff]
    %226 = vmatprep.subr.mxu0 0.0
    %227 = vmatpush1.msra.mxu0 %v210
    %228 = vmatprep.subr.mxu0 0.0
    %229 = vmatpush1.msra.mxu0 %v211
    %230 = vmatprep.subr.mxu0 0.0
    %231 = vmatpush1.msra.mxu0 %v212
    %232 = vmatprep.subr.mxu0 0.0
    %233 = vmatpush1.msra.mxu0 %v213
    %234 = vmatprep.subr.mxu0 0.0
    %235 = vmatpush1.msra.mxu0 %v214
    %236 = vmatprep.subr.mxu0 0.0
    %237 = vmatpush1.msra.mxu0 %v215
    %238 = vmatprep.subr.mxu0 0.0
    %239 = vmatpush1.msra.mxu0 %v216
    %240 = vmatprep.subr.mxu0 0.0
    %241 = vmatpush1.msra.mxu0 %v217
    %242 = vmatprep.subr.mxu0 0.0
    %243 = vmatpush1.msra.mxu0 %v218
    %244 = vmatprep.subr.mxu0 0.0
    %245 = vmatpush1.msra.mxu0 %v219
    %246 = vmatprep.subr.mxu0 0.0
    %247 = vmatpush1.msra.mxu0 %v220
    %248 = vmatprep.subr.mxu0 0.0
    %249 = vmatpush1.msra.mxu0 %v221
    %250 = vmatprep.subr.mxu0 0.0
    %251 = vmatpush1.msra.mxu0 %v222
    %252 = vmatprep.subr.mxu0 0.0
    %253 = vmatpush1.msra.mxu0 %v223
    %254 = vmatprep.subr.mxu0 0.0
    %255 = vmatpush1.msra.mxu0 %v224
    %256 = vmatprep.subr.mxu0 0.0
    %257 = vmatpush1.msra.mxu0 %v225
    %258 = vmatprep.subr.mxu0 0.0
    %259 = vmatpush1.msra.mxu0 0.0
    %260 = vmatprep.subr.mxu0 0.0
    %261 = vmatpush1.msra.mxu0 0.0
    %262 = vmatprep.subr.mxu0 0.0
    %263 = vmatpush1.msra.mxu0 0.0
    %264 = vmatprep.subr.mxu0 0.0
    %265 = vmatpush1.msra.mxu0 0.0
    %266 = vmatprep.subr.mxu0 0.0
    %267 = vmatpush1.msra.mxu0 0.0
    %268 = vmatprep.subr.mxu0 0.0
    %269 = vmatpush1.msra.mxu0 0.0
    %270 = vmatprep.subr.mxu0 0.0
    %271 = vmatpush1.msra.mxu0 0.0
    %272 = vmatprep.subr.mxu0 0.0
    %273 = vmatpush1.msra.mxu0 0.0
    %274 = vmatprep.subr.mxu0 0.0
    %275 = vmatpush1.msra.mxu0 0.0
    %276 = vmatprep.subr.mxu0 0.0
    %277 = vmatpush1.msra.mxu0 0.0
    %278 = vmatprep.subr.mxu0 0.0
    %279 = vmatpush1.msra.mxu0 0.0
    %280 = vmatprep.subr.mxu0 0.0
    %281 = vmatpush1.msra.mxu0 0.0
    %282 = vmatprep.subr.mxu0 0.0
    %283 = vmatpush1.msra.mxu0 0.0
    %284 = vmatprep.subr.mxu0 0.0
    %285 = vmatpush1.msra.mxu0 0.0
    %286 = vmatprep.subr.mxu0 0.0
    %287 = vmatpush1.msra.mxu0 0.0
    %288 = vmatprep.subr.mxu0 0.0
    %289 = vmatpush1.msra.mxu0 0.0
    %290 = vmatprep.mubr.f32.mxu0 0.0
    %291 = vmatmul.mubr.f32.gmra.mrb[0].mxu0 %v206
    %v292 = vpop.f32.mrb[0].mxu0
    %v293 = vadd.f32 0.0, %v292
    %v294 = vpop.f32.mrb[0].mxu0
    %295 = vmatprep.mubr.f32.mxu0 0.0
    %296 = vmatmul.mubr.f32.gmra.mrb[0].mxu0 %v207
    %v297 = vpop.f32.mrb[0].mxu0
    %v298 = vadd.f32 0.0, %v297
    %v299 = vpop.f32.mrb[0].mxu0
    %300 = vdwg.mxu0
    %v301 = vadd.f32 %v208, %v293
    %v302 = vadd.f32 %v209, %v298
    %303 = vst [vmem:[#allocation2] sm:$0xff] %v301
    %304 = vst [vmem:[#allocation2 + $0x8] sm:$0xff] %v302
    // Predicated region
    $region46: #{tpu_custom_call.1} parent=1 // pred_check
      %p305 = pneg %p85
    $region47: #{tpu_custom_call.1} parent=1 // pred_check_branch
      %307 = sbr.rel (%p305) target = $region49
    $region48: #{tpu_custom_call.1} parent=1 // pred_region
      %v308 = vld [vmem:[#allocation2] sm:$0xff]
      %v309 = vld [vmem:[#allocation2 + $0x8] sm:$0xff]
      %310 = vst [vmem:[#allocation12] sm:$0xff] %v308
      %311 = vst [vmem:[#allocation12 + $0x8] sm:$0xff] %v309
    $region49: #{tpu_custom_call.1} parent=1 // pred_fallthru
      _
    // Predicated region
    $region50: #{tpu_custom_call.1} parent=1 // pred_check
      _
    $region51: #{tpu_custom_call.1} parent=1 // pred_check_branch
      %313 = sbr.rel (0) target = $region53
    $region52: #{tpu_custom_call.1} parent=1 // pred_region
      %s315 = ssub.s32 256, 256
      %316 = vsyncadd [#allocation5], %s315
      %s317 = sshll.u32 [#allocation12], 4
      %s318 = int_to_ptr.vmem [resolvable:$true] %s317
      %323 = dma.vmem_to_hbm [thread:$0]  %s318, 256, %s5, [#allocation5], 128, 128, 8
    $region53: #{tpu_custom_call.1} parent=1 // pred_fallthru
      _
    // Predicated region
    $region54: #{tpu_custom_call.1} parent=1 // pred_check
      _
    $region55: #{tpu_custom_call.1} parent=1 // pred_check_branch
      %325 = sbr.rel (0) target = $region57
    $region56: #{tpu_custom_call.1} parent=1 // pred_region
      %326 = dma.done [#allocation5], 256
    $region57: #{tpu_custom_call.1} parent=1 // pred_fallthru
      _
    %327 = vsyncpa [#allocation4], 1
    %328 = vsyncpa [#allocation7], 1
    %329 = vsyncpa [#allocation10], 1
    %330 = vsyncpa [#allocation5], 1

</llo_original>
